<compile_context>
chip_gen: v7x
topology: tpu7x:2x2x1
jax: 0.10.0
libtpu: 0.0.40
codegen_flags: <defaults>
</compile_context>

<pallas_src>
import numpy as np
import jax
import jax.numpy as jnp
from jax import lax
from jax.experimental import pallas as pl
from jax.experimental.pallas import tpu as pltpu


def _round_up(x, m):
    return int(m * pl.cdiv(x, m))


def _make_kernel(num_groups):
    """Kernel over one batch tile.

    Refs (in order):
      lab_ref    : VMEM [TB, P] int32  - label of sample b for param group p, -1 if unused
      logit refs : P refs, VMEM [TB, C_p] (f32 or bf16)
      out_ref    : VMEM [TB, 1] f32    - per-sample summed CE loss
    """

    def kernel(lab_ref, *refs):
        logit_refs = refs[:num_groups]
        out_ref = refs[num_groups]
        tb = lab_ref.shape[0]
        total = jnp.zeros((tb, 1), jnp.float32)
        for p in range(num_groups):  # P is small and static -> fully unrolled
            x = logit_refs[p][...].astype(jnp.float32)          # [TB, C_p]
            c = x.shape[-1]
            lab = lab_ref[:, p:p + 1]                           # [TB, 1] int32
            valid = (lab >= 0).astype(jnp.float32)              # [TB, 1]
            # logsumexp over the group's classes (lane axis)
            m = jnp.max(x, axis=-1, keepdims=True)              # [TB, 1]
            lse = m + jnp.log(jnp.sum(jnp.exp(x - m), axis=-1, keepdims=True))
            # gather x[b, lab[b]] with one compare+select+lane-reduce
            lane = lax.broadcasted_iota(jnp.int32, (1, c), 1)   # [1, C_p]
            picked = jnp.sum(jnp.where(lane == lab, x, 0.0),
                             axis=-1, keepdims=True)            # [TB, 1]
            # CrossEntropy = lse - logit[label]; unused groups contribute 0
            total = total + valid * (lse - picked)
        out_ref[...] = total

    return kernel


def hierarchical_softmax_loss(hier_logits, hier_label, hier_param):
    """hier_logits: list of [B, C_p] arrays; hier_label/hier_param: [B, G] int (-1 padded)."""
    B, G = hier_label.shape
    P = len(hier_logits)
    counts = [int(l.shape[1]) for l in hier_logits]

    # ---- per-chip sizing (fall back to the conservative v7x budget) ----------
    try:
        vmem_cap = int(pltpu.get_tpu_info().vmem_capacity_bytes)
    except Exception:
        vmem_cap = 64 << 20
    if vmem_cap >= (96 << 20):            # v5e / v6e: 128 MiB VMEM, HBM-bound
        target_block_bytes, vmem_limit = 16 << 20, 96 << 20
    else:                                 # v7x: 64 MiB VMEM per TensorCore
        target_block_bytes, vmem_limit = 8 << 20, 44 << 20

    # Per-sample HBM/VMEM bytes across all groups (minor dim is lane-padded to
    # 128 in the tiled layout; size with 4 B/elem since the kernel upcasts).
    row_bytes = 4 * sum(_round_up(c, 128) for c in counts)

    B8 = _round_up(B, 8)
    rows_fit = max(8, (target_block_bytes // row_bytes) // 8 * 8)
    TB = min(B8, rows_fit)
    # If everything fits one step but the batch is big enough, split into >=2
    # steps so both v7x TensorCores get work (neutral on v5e/v6e).
    if TB == B8 and B8 >= 256:
        TB = _round_up(B8 // 2, 8)
    B_pad = TB * int(pl.cdiv(B, TB))

    # ---- tiny host-side precompute: label per (sample, param group) ----------
    labels = jnp.asarray(hier_label, jnp.int32)
    params = jnp.asarray(hier_param, jnp.int32)
    group_ids = jnp.arange(P, dtype=jnp.int32)
    match = (labels[:, :, None] >= 0) & (params[:, :, None] == group_ids)   # [B,G,P]
    lab_for_p = jnp.max(jnp.where(match, labels[:, :, None], -1), axis=1)   # [B,P]
    lab_for_p = jnp.pad(lab_for_p, ((0, B_pad - B), (0, 0)), constant_values=-1)

    # ---- pallas_call: logits arrays are passed as-is (no pad/stack copies) ----
    # Blocks may overrun the B rows of the logits arrays; the overrun rows hold
    # undefined data but their losses are sliced away before the mean, and their
    # lab_for_p rows are -1 so they never select anything meaningful.
    in_specs = [pl.BlockSpec((TB, P), lambda i: (i, 0))]
    for l in hier_logits:
        in_specs.append(pl.BlockSpec((TB, int(l.shape[1])), lambda i: (i, 0)))

    per_sample = pl.pallas_call(
        _make_kernel(P),
        out_shape=jax.ShapeDtypeStruct((B_pad, 1), jnp.float32),
        grid_spec=pltpu.PrefetchScalarGridSpec(
            num_scalar_prefetch=0,
            grid=(B_pad // TB,),
            in_specs=in_specs,
            out_specs=pl.BlockSpec((TB, 1), lambda i: (i, 0)),
        ),
        compiler_params=pltpu.CompilerParams(
            dimension_semantics=("parallel",),   # samples are independent
            vmem_limit_bytes=vmem_limit,
        ),
    )(lab_for_p, *hier_logits)

    return jnp.mean(per_sample[:B, 0])  # total_loss.mean(dim=0); padded rows excluded


def _reference(hier_logits, labels, params):
    """Pure numpy re-implementation of the PyTorch module."""
    labels = np.asarray(labels)
    params = np.asarray(params)
    B, G = labels.shape
    total = []
    for b in range(B):
        s = 0.0
        for g in range(G):
            l, p = int(labels[b, g]), int(params[b, g])
            if l == -1:
                continue
            logit = np.asarray(hier_logits[p][b], dtype=np.float64)
            m = logit.max()
            lse = m + np.log(np.sum(np.exp(logit - m)))
            s += lse - logit[l]
        total.append(s)
    return float(np.mean(total))


if __name__ == "__main__":
    key = jax.random.PRNGKey(0)
    B, G = 4, 3                       # batch, number of hierarchy levels
    class_counts = [5, 7, 4]          # classes per param group (ragged)

    keys = jax.random.split(key, len(class_counts))
    # deterministic synthetic "decoder outputs": one logit tensor per param group
    hier_logits = [
        jax.random.normal(k, (B, c), dtype=jnp.float32)
        for k, c in zip(keys, class_counts)
    ]
    hier_label = jnp.array(
        [[2, 4, -1],
         [1, 6, 3],
         [0, -1, -1],
         [3, 2, 1]], dtype=jnp.int32)
    hier_param = jnp.array(
        [[0, 1, -1],
         [0, 1, 2],
         [0, -1, -1],
         [0, 1, 2]], dtype=jnp.int32)

    loss = hierarchical_softmax_loss(hier_logits, hier_label, hier_param)
    loss = jax.block_until_ready(loss)

    ref = _reference([np.asarray(l) for l in hier_logits], hier_label, hier_param)
    np.testing.assert_allclose(np.asarray(loss), ref, rtol=1e-4, atol=1e-4)
    print("KERNEL_OK")
</pallas_src>

<mosaic_0001>
module attributes {stable_mosaic.version = 11 : i64} {
  func.func @kernel(%arg0: i32, %arg1: memref<8x3xi32, #tpu.memory_space<vmem>>, %arg2: memref<8x5xf32, #tpu.memory_space<vmem>>, %arg3: memref<8x7xf32, #tpu.memory_space<vmem>>, %arg4: memref<8x4xf32, #tpu.memory_space<vmem>>, %arg5: memref<8x1xf32, #tpu.memory_space<vmem>>) attributes {dimension_semantics = [#tpu.dimension_semantics<parallel>], iteration_bounds = array<i64: 1>, scalar_prefetch = 0 : i64, scratch_operands = 0 : i64, tpu.core_type = #tpu.core_type<tc>, window_params = [{transform_indices = @transform_0, window_bounds = array<i64: 8, 3>}, {transform_indices = @transform_1, window_bounds = array<i64: 8, 5>}, {transform_indices = @transform_2, window_bounds = array<i64: 8, 7>}, {transform_indices = @transform_3, window_bounds = array<i64: 8, 4>}, {transform_indices = @transform_4, window_bounds = array<i64: 8, 1>}]} {
    %cst = arith.constant 0.000000e+00 : f32
    %0 = vector.broadcast %cst : f32 to vector<8x1xf32>
    %c0 = arith.constant 0 : index
    %c0_0 = arith.constant 0 : index
    %1 = vector.load %arg2[%c0, %c0_0] : memref<8x5xf32, #tpu.memory_space<vmem>>, vector<8x5xf32>
    %c0_1 = arith.constant 0 : index
    %c0_2 = arith.constant 0 : index
    %2 = vector.load %arg1[%c0_1, %c0_2] : memref<8x3xi32, #tpu.memory_space<vmem>>, vector<8x1xi32>
    %c0_i32 = arith.constant 0 : i32
    %3 = vector.broadcast %c0_i32 : i32 to vector<8x1xi32>
    %4 = arith.cmpi sge, %2, %3 : vector<8x1xi32>
    %5 = arith.extui %4 : vector<8x1xi1> to vector<8x1xi32>
    %6 = arith.sitofp %5 : vector<8x1xi32> to vector<8x1xf32>
    %cst_3 = arith.constant dense<0xFF800000> : vector<8xf32>
    %7 = vector.multi_reduction <maximumf>, %1, %cst_3 [1] : vector<8x5xf32> to vector<8xf32>
    %8 = vector.shape_cast %7 : vector<8xf32> to vector<8x1xf32>
    %9 = vector.broadcast %8 : vector<8x1xf32> to vector<8x5xf32>
    %10 = arith.subf %1, %9 : vector<8x5xf32>
    %11 = math.exp %10 : vector<8x5xf32>
    %cst_4 = arith.constant dense<0.000000e+00> : vector<8xf32>
    %12 = vector.multi_reduction <add>, %11, %cst_4 [1] : vector<8x5xf32> to vector<8xf32>
    %13 = vector.shape_cast %12 : vector<8xf32> to vector<8x1xf32>
    %14 = math.log %13 : vector<8x1xf32>
    %15 = arith.addf %8, %14 : vector<8x1xf32>
    %16 = tpu.iota {dimensions = array<i32: 1>} : vector<1x5xi32>
    %17 = vector.broadcast %16 : vector<1x5xi32> to vector<8x5xi32>
    %18 = vector.broadcast %2 : vector<8x1xi32> to vector<8x5xi32>
    %19 = arith.cmpi eq, %17, %18 : vector<8x5xi32>
    %cst_5 = arith.constant 0.000000e+00 : f32
    %20 = vector.broadcast %cst_5 : f32 to vector<8x5xf32>
    %21 = arith.select %19, %1, %20 : vector<8x5xi1>, vector<8x5xf32>
    %cst_6 = arith.constant dense<0.000000e+00> : vector<8xf32>
    %22 = vector.multi_reduction <add>, %21, %cst_6 [1] : vector<8x5xf32> to vector<8xf32>
    %23 = vector.shape_cast %22 : vector<8xf32> to vector<8x1xf32>
    %24 = arith.subf %15, %23 : vector<8x1xf32>
    %25 = arith.mulf %6, %24 : vector<8x1xf32>
    %26 = arith.addf %0, %25 : vector<8x1xf32>
    %c0_7 = arith.constant 0 : index
    %c0_8 = arith.constant 0 : index
    %27 = vector.load %arg3[%c0_7, %c0_8] : memref<8x7xf32, #tpu.memory_space<vmem>>, vector<8x7xf32>
    %c0_9 = arith.constant 0 : index
    %c1 = arith.constant 1 : index
    %28 = vector.load %arg1[%c0_9, %c1] : memref<8x3xi32, #tpu.memory_space<vmem>>, vector<8x1xi32>
    %c0_i32_10 = arith.constant 0 : i32
    %29 = vector.broadcast %c0_i32_10 : i32 to vector<8x1xi32>
    %30 = arith.cmpi sge, %28, %29 : vector<8x1xi32>
    %31 = arith.extui %30 : vector<8x1xi1> to vector<8x1xi32>
    %32 = arith.sitofp %31 : vector<8x1xi32> to vector<8x1xf32>
    %cst_11 = arith.constant dense<0xFF800000> : vector<8xf32>
    %33 = vector.multi_reduction <maximumf>, %27, %cst_11 [1] : vector<8x7xf32> to vector<8xf32>
    %34 = vector.shape_cast %33 : vector<8xf32> to vector<8x1xf32>
    %35 = vector.broadcast %34 : vector<8x1xf32> to vector<8x7xf32>
    %36 = arith.subf %27, %35 : vector<8x7xf32>
    %37 = math.exp %36 : vector<8x7xf32>
    %cst_12 = arith.constant dense<0.000000e+00> : vector<8xf32>
    %38 = vector.multi_reduction <add>, %37, %cst_12 [1] : vector<8x7xf32> to vector<8xf32>
    %39 = vector.shape_cast %38 : vector<8xf32> to vector<8x1xf32>
    %40 = math.log %39 : vector<8x1xf32>
    %41 = arith.addf %34, %40 : vector<8x1xf32>
    %42 = tpu.iota {dimensions = array<i32: 1>} : vector<1x7xi32>
    %43 = vector.broadcast %42 : vector<1x7xi32> to vector<8x7xi32>
    %44 = vector.broadcast %28 : vector<8x1xi32> to vector<8x7xi32>
    %45 = arith.cmpi eq, %43, %44 : vector<8x7xi32>
    %cst_13 = arith.constant 0.000000e+00 : f32
    %46 = vector.broadcast %cst_13 : f32 to vector<8x7xf32>
    %47 = arith.select %45, %27, %46 : vector<8x7xi1>, vector<8x7xf32>
    %cst_14 = arith.constant dense<0.000000e+00> : vector<8xf32>
    %48 = vector.multi_reduction <add>, %47, %cst_14 [1] : vector<8x7xf32> to vector<8xf32>
    %49 = vector.shape_cast %48 : vector<8xf32> to vector<8x1xf32>
    %50 = arith.subf %41, %49 : vector<8x1xf32>
    %51 = arith.mulf %32, %50 : vector<8x1xf32>
    %52 = arith.addf %26, %51 : vector<8x1xf32>
    %c0_15 = arith.constant 0 : index
    %c0_16 = arith.constant 0 : index
    %53 = vector.load %arg4[%c0_15, %c0_16] : memref<8x4xf32, #tpu.memory_space<vmem>>, vector<8x4xf32>
    %c0_17 = arith.constant 0 : index
    %c2 = arith.constant 2 : index
    %54 = vector.load %arg1[%c0_17, %c2] : memref<8x3xi32, #tpu.memory_space<vmem>>, vector<8x1xi32>
    %c0_i32_18 = arith.constant 0 : i32
    %55 = vector.broadcast %c0_i32_18 : i32 to vector<8x1xi32>
    %56 = arith.cmpi sge, %54, %55 : vector<8x1xi32>
    %57 = arith.extui %56 : vector<8x1xi1> to vector<8x1xi32>
    %58 = arith.sitofp %57 : vector<8x1xi32> to vector<8x1xf32>
    %cst_19 = arith.constant dense<0xFF800000> : vector<8xf32>
    %59 = vector.multi_reduction <maximumf>, %53, %cst_19 [1] : vector<8x4xf32> to vector<8xf32>
    %60 = vector.shape_cast %59 : vector<8xf32> to vector<8x1xf32>
    %61 = vector.broadcast %60 : vector<8x1xf32> to vector<8x4xf32>
    %62 = arith.subf %53, %61 : vector<8x4xf32>
    %63 = math.exp %62 : vector<8x4xf32>
    %cst_20 = arith.constant dense<0.000000e+00> : vector<8xf32>
    %64 = vector.multi_reduction <add>, %63, %cst_20 [1] : vector<8x4xf32> to vector<8xf32>
    %65 = vector.shape_cast %64 : vector<8xf32> to vector<8x1xf32>
    %66 = math.log %65 : vector<8x1xf32>
    %67 = arith.addf %60, %66 : vector<8x1xf32>
    %68 = tpu.iota {dimensions = array<i32: 1>} : vector<1x4xi32>
    %69 = vector.broadcast %68 : vector<1x4xi32> to vector<8x4xi32>
    %70 = vector.broadcast %54 : vector<8x1xi32> to vector<8x4xi32>
    %71 = arith.cmpi eq, %69, %70 : vector<8x4xi32>
    %cst_21 = arith.constant 0.000000e+00 : f32
    %72 = vector.broadcast %cst_21 : f32 to vector<8x4xf32>
    %73 = arith.select %71, %53, %72 : vector<8x4xi1>, vector<8x4xf32>
    %cst_22 = arith.constant dense<0.000000e+00> : vector<8xf32>
    %74 = vector.multi_reduction <add>, %73, %cst_22 [1] : vector<8x4xf32> to vector<8xf32>
    %75 = vector.shape_cast %74 : vector<8xf32> to vector<8x1xf32>
    %76 = arith.subf %67, %75 : vector<8x1xf32>
    %77 = arith.mulf %58, %76 : vector<8x1xf32>
    %78 = arith.addf %52, %77 : vector<8x1xf32>
    %c0_23 = arith.constant 0 : index
    %c0_24 = arith.constant 0 : index
    %79 = vector.load %arg5[%c0_23, %c0_24] : memref<8x1xf32, #tpu.memory_space<vmem>>, vector<8x1xf32>
    tpu.vector_store %arg5[%c0_23, %c0_24], %78 {strides = array<i32>} : memref<8x1xf32, #tpu.memory_space<vmem>>, vector<8x1xf32>,
    return
  }
  func.func @transform_0(%arg0: i32) -> (i32, i32) {
    %c0_i32 = arith.constant 0 : i32
    %c0_i32_0 = arith.constant 0 : i32
    return %arg0, %c0_i32 : i32, i32
  }
  func.func @transform_1(%arg0: i32) -> (i32, i32) {
    %c0_i32 = arith.constant 0 : i32
    %c0_i32_0 = arith.constant 0 : i32
    return %arg0, %c0_i32 : i32, i32
  }
  func.func @transform_2(%arg0: i32) -> (i32, i32) {
    %c0_i32 = arith.constant 0 : i32
    %c0_i32_0 = arith.constant 0 : i32
    return %arg0, %c0_i32 : i32, i32
  }
  func.func @transform_3(%arg0: i32) -> (i32, i32) {
    %c0_i32 = arith.constant 0 : i32
    %c0_i32_0 = arith.constant 0 : i32
    return %arg0, %c0_i32 : i32, i32
  }
  func.func @transform_4(%arg0: i32) -> (i32, i32) {
    %c0_i32 = arith.constant 0 : i32
    %c0_i32_0 = arith.constant 0 : i32
    return %arg0, %c0_i32 : i32, i32
  }
}

</mosaic_0001>

<llo_original>
// kernel: tpu_custom_call.1
$region0: #{tpu_custom_call.1}
  #allocation0 [shape = 'u32[]', space=smem, size = 0x4, offset = 0x4, fixed_abs, tag = 'smem constant byte address 0x4 - core index']
  #allocation1 [shape = 'u32[144,128]{1,0:T(1,128)}', space=vmem, size = 0x12000, scoped, tag = 'internal scratch']
  %s0 = inlined_call_operand.vmem [shape: s32[8,3], index: 0, kind: input, shape index: {}]
  %s1 = inlined_call_operand.vmem [shape: f32[4,5], index: 1, kind: input, shape index: {}]
  %s2 = inlined_call_operand.vmem [shape: f32[4,7], index: 2, kind: input, shape index: {}]
  %s3 = inlined_call_operand.vmem [shape: f32[4,4], index: 3, kind: input, shape index: {}]
  %s4 = inlined_call_operand.vmem [shape: f32[8,1], index: 4, kind: output, shape index: {}]
  %s5 = sld [smem:[#allocation0]]
  $region26: #{tpu_custom_call.1} parent=0
    _
  %s7 = ssub.s32 1, %s5
  %s8 = scalar_select 0, %s7, %s5
  // Predicated region
  $region2: #{tpu_custom_call.1} parent=0 // pred_check
    _
  $region3: #{tpu_custom_call.1} parent=0 // pred_check_branch
    %10 = sbr.rel (0) target = $region5
  $region4: #{tpu_custom_call.1} parent=0 // pred_region
    _
  $region5: #{tpu_custom_call.1} parent=0 // pred_fallthru
    _
  // Predicated region
  $region6: #{tpu_custom_call.1} parent=0 // pred_check
    _
  $region7: #{tpu_custom_call.1} parent=0 // pred_check_branch
    %12 = sbr.rel (0) target = $region9
  $region8: #{tpu_custom_call.1} parent=0 // pred_region
    _
  $region9: #{tpu_custom_call.1} parent=0 // pred_fallthru
    _
  // Predicated region
  $region10: #{tpu_custom_call.1} parent=0 // pred_check
    _
  $region11: #{tpu_custom_call.1} parent=0 // pred_check_branch
    %14 = sbr.rel (0) target = $region13
  $region12: #{tpu_custom_call.1} parent=0 // pred_region
    _
  $region13: #{tpu_custom_call.1} parent=0 // pred_fallthru
    _
  // Predicated region
  $region14: #{tpu_custom_call.1} parent=0 // pred_check
    _
  $region15: #{tpu_custom_call.1} parent=0 // pred_check_branch
    %16 = sbr.rel (0) target = $region17
  $region16: #{tpu_custom_call.1} parent=0 // pred_region
    _
  $region17: #{tpu_custom_call.1} parent=0 // pred_fallthru
    _
  %v17 = vld [vmem:[%s1] sm:$0xff]
  %v18 = vld [vmem:[%s0] sm:$0xff]
  %vm19 = vcmp.ge.s32.totalorder %v18, 0
  %v20 = vsel %vm19, 1, 0
  %v21 = vcvt.s32.f32 %v20
  %vm22 = vcmask 39936
  %v23 = vsel %vm22, %v17, -inf
  %24 = vmax.xlane.f32.xlu0 %v23
  %v25 = vpop.xlane.xlu0 %24
  %v26 = vsub.f32 %v17, %v25
  %v27 = vmul.f32 %v26, 1.442695
  %v28 = vpow.pop %v27
  %v29 = vsel %vm22, %v28, 0.0
  %30 = vadd.xlane.f32.xlu0 %v29
  %v31 = vpop.xlane.xlu0 %30
  %v32 = vlog2.pop %v31
  %v33 = vmul.f32 %v32, 0.6931472
  %v34 = vadd.f32 %v25, %v33
  %v35 = vlaneseq
  %v36 = vand.u32 %v35, 127
  %37 = vset.pattern.permute.xlu0 0
  %38 = vperm.xlu0 %37, %v18
  %v39 = vpop.permute.xlu0 %38
  %vm40 = vcmp.eq.s32.totalorder %v36, %v39
  %v41 = vsel %vm40, %v17, 0.0
  %v42 = vsel %vm22, %v41, 0.0
  %43 = vadd.xlane.f32.xlu0 %v42
  %v44 = vpop.xlane.xlu0 %43
  %v45 = vsub.f32 %v34, %v44
  %v46 = vmul.f32 %v21, %v45
  %v47 = vadd.f32 %v46, 0.0
  %v48 = vld [vmem:[%s2] sm:$0xff]
  %vm49 = vcmask 56320
  %v50 = vsel %vm49, %v48, -inf
  %51 = vmax.xlane.f32.xlu0 %v50
  %v52 = vpop.xlane.xlu0 %51
  %v53 = vsub.f32 %v48, %v52
  %v54 = vmul.f32 %v53, 1.442695
  %v55 = vpow.pop %v54
  %v56 = vsel %vm49, %v55, 0.0
  %57 = vadd.xlane.f32.xlu0 %v56
  %v58 = vpop.xlane.xlu0 %57
  %v59 = vlog2.pop %v58
  %v60 = vmul.f32 %v59, 0.6931472
  %v61 = vadd.f32 %v52, %v60
  %62 = vset.pattern.permute.xlu0 1
  %63 = vperm.xlu0 %62, %v18
  %v64 = vpop.permute.xlu0 %63
  %vm65 = vcmp.eq.s32.totalorder %v36, %v64
  %v66 = vsel %vm65, %v48, 0.0
  %v67 = vsel %vm49, %v66, 0.0
  %68 = vadd.xlane.f32.xlu0 %v67
  %v69 = vpop.xlane.xlu0 %68
  %v70 = vsub.f32 %v61, %v69
  %v71 = vmul.f32 %v21, %v70
  %73 = vrot.lane.b32.xlu0 %v71, 127
  %v74 = vpop.permute.xlu0 %73
  %v76 = vadd.f32 %v47, %v74
  %v77 = vld [vmem:[%s3] sm:$0xff]
  %vm78 = vcmask 31744
  %v79 = vsel %vm78, %v77, -inf
  %80 = vmax.xlane.f32.xlu0 %v79
  %v81 = vpop.xlane.xlu0 %80
  %v82 = vsub.f32 %v77, %v81
  %v83 = vmul.f32 %v82, 1.442695
  %v84 = vpow.pop %v83
  %v85 = vsel %vm78, %v84, 0.0
  %86 = vadd.xlane.f32.xlu0 %v85
  %v87 = vpop.xlane.xlu0 %86
  %v88 = vlog2.pop %v87
  %v89 = vmul.f32 %v88, 0.6931472
  %v90 = vadd.f32 %v81, %v89
  %91 = vset.pattern.permute.xlu0 2
  %92 = vperm.xlu0 %91, %v18
  %v93 = vpop.permute.xlu0 %92
  %vm94 = vcmp.eq.s32.totalorder %v36, %v93
  %v95 = vsel %vm94, %v77, 0.0
  %v96 = vsel %vm78, %v95, 0.0
  %97 = vadd.xlane.f32.xlu0 %v96
  %v98 = vpop.xlane.xlu0 %97
  %v99 = vsub.f32 %v90, %v98
  %v100 = vmul.f32 %v21, %v99
  %102 = vrot.lane.b32.xlu0 %v100, 126
  %v103 = vpop.permute.xlu0 %102
  %v105 = vadd.f32 %v76, %v103
  %vm106 = vcmask 7168
  %107 = vst.msk [vmem:[%s4] sm:$0xff] %vm106, %v105
  // Predicated region
  $region18: #{tpu_custom_call.1} parent=0 // pred_check
    _
  $region19: #{tpu_custom_call.1} parent=0 // pred_check_branch
    %109 = sbr.rel (0) target = $region21
  $region20: #{tpu_custom_call.1} parent=0 // pred_region
    _
  $region21: #{tpu_custom_call.1} parent=0 // pred_fallthru
    _
  // Predicated region
  $region22: #{tpu_custom_call.1} parent=0 // pred_check
    _
  $region23: #{tpu_custom_call.1} parent=0 // pred_check_branch
    %111 = sbr.rel (0) target = $region25
  $region24: #{tpu_custom_call.1} parent=0 // pred_region
    _
  $region25: #{tpu_custom_call.1} parent=0 // pred_fallthru
    _

</llo_original>
